<compile_context>
chip_gen: v5e
topology: v5e:2x2
jax: 0.10.0
libtpu: 0.0.40
codegen_flags: <defaults>
</compile_context>

<pallas_src>
import jax
import jax.numpy as jnp
import numpy as np
from jax.experimental import pallas as pl
from jax.experimental.pallas import tpu as pltpu


def _copy_kernel(emb_ref, out_ref):
    # Row-block i of the output is row-block i of the table (pos = arange).
    out_ref[...] = emb_ref[...]


def _pick_block_rows(maxlen: int, d_model: int, dtype_bytes: int,
                     vmem_budget_bytes: int = 12 << 20,
                     max_rows_cap: int = 2048) -> int:
    """Largest multiple-of-8 divisor of maxlen that fits a conservative VMEM budget
    (double-buffered input + output ~= 4 buffers) and leaves a grid of >= 2 steps."""
    bytes_per_row_all_buffers = 4 * d_model * dtype_bytes
    max_rows_by_vmem = max(8, vmem_budget_bytes // bytes_per_row_all_buffers)
    target = min(max_rows_by_vmem, max_rows_cap, maxlen)
    if maxlen >= 16:
        # Keep at least 2 grid steps so v7x (2 TCs) shards the work.
        target = min(target, maxlen // 2)
    best = 8
    r = 8
    while r <= target:
        if maxlen % r == 0:
            best = r
        r += 8
    return best


def positional_embedding_tsp(emb_weight: jax.Array,
                             *,
                             block_rows: int | None = None,
                             elide_identity_copy: bool = False) -> jax.Array:
    """Pallas equivalent of PositionalEmbeddingTSP.forward().

    emb_weight: (maxlen, d_model) float32 embedding table.
    Returns:    (maxlen, d_model) float32 -- emb_weight gathered at arange(maxlen).
    """
    maxlen, d_model = emb_weight.shape
    assert maxlen % 8 == 0, "maxlen must be a multiple of 8 (f32 sublane tiling)"

    if elide_identity_copy:
        # Gathering at arange(maxlen) is the identity on rows: no kernel needed.
        return emb_weight

    dtype_bytes = jnp.dtype(emb_weight.dtype).itemsize
    if block_rows is None:
        block_rows = _pick_block_rows(maxlen, d_model, dtype_bytes)
    assert maxlen % block_rows == 0, "block_rows must divide maxlen"
    assert block_rows % 8 == 0, "block_rows must be a multiple of 8 for f32"
    n_blocks = maxlen // block_rows

    # Keep well under every generation's scoped-VMEM default (16 MiB on v5e);
    # only raise the limit explicitly if a caller forces a huge block_rows.
    footprint = 4 * block_rows * d_model * dtype_bytes
    vmem_limit = None
    if footprint > (12 << 20):
        vmem_limit = min(footprint * 2, 60 << 20)  # headroom, stays under v7x 64 MiB

    compiler_params = pltpu.CompilerParams(
        dimension_semantics=("parallel",),
        vmem_limit_bytes=vmem_limit,
    )

    # TODO(synk): arbitrary (non-arange) index gathers would need a scalar-prefetched
    # data-dependent index_map; the module's forward only ever uses arange(maxlen).
    return pl.pallas_call(
        _copy_kernel,
        out_shape=jax.ShapeDtypeStruct((maxlen, d_model), emb_weight.dtype),
        grid=(n_blocks,),
        in_specs=[pl.BlockSpec((block_rows, d_model), lambda i: (i, 0))],
        out_specs=pl.BlockSpec((block_rows, d_model), lambda i: (i, 0)),
        compiler_params=compiler_params,
    )(emb_weight)


def xavier_uniform(key, shape, gain):
    """Matches torch.nn.init.xavier_uniform_ for a 2-D (fan_out, fan_in) weight."""
    fan_out, fan_in = shape  # nn.Embedding weight: (num_embeddings, embedding_dim)
    bound = gain * float(np.sqrt(6.0 / (fan_in + fan_out)))
    return jax.random.uniform(key, shape, dtype=jnp.float32, minval=-bound, maxval=bound)


if __name__ == "__main__":
    init_gain = 0.01
    key = jax.random.PRNGKey(0)

    # Small demo shape.
    d_model, maxlen = 128, 64
    emb_weight = xavier_uniform(key, (maxlen, d_model), init_gain)
    out = jax.block_until_ready(positional_embedding_tsp(emb_weight))
    ref = emb_weight[jnp.arange(maxlen)]
    assert out.shape == (maxlen, d_model) and out.dtype == jnp.float32
    assert bool(jnp.allclose(out, ref)), "kernel output mismatch vs reference (64)"

    # Module-default shape (still small): exercises the multi-block grid path.
    d_model2, maxlen2 = 128, 512
    key2, _ = jax.random.split(key)
    emb_weight2 = xavier_uniform(key2, (maxlen2, d_model2), init_gain)
    out2 = jax.block_until_ready(positional_embedding_tsp(emb_weight2))
    assert bool(jnp.allclose(out2, emb_weight2)), "kernel output mismatch vs reference (512)"

    print("KERNEL_OK")
</pallas_src>

<mosaic_0001>
module attributes {stable_mosaic.version = 11 : i64} {
  func.func @_copy_kernel(%arg0: i32, %arg1: memref<32x128xf32, #tpu.memory_space<vmem>>, %arg2: memref<32x128xf32, #tpu.memory_space<vmem>>) attributes {dimension_semantics = [#tpu.dimension_semantics<parallel>], iteration_bounds = array<i64: 2>, scalar_prefetch = 0 : i64, scratch_operands = 0 : i64, tpu.core_type = #tpu.core_type<tc>, window_params = [{transform_indices = @transform_0, window_bounds = array<i64: 32, 128>}, {transform_indices = @transform_1, window_bounds = array<i64: 32, 128>}]} {
    %c0 = arith.constant 0 : index
    %c0_0 = arith.constant 0 : index
    %0 = vector.load %arg1[%c0, %c0_0] : memref<32x128xf32, #tpu.memory_space<vmem>>, vector<32x128xf32>
    %c0_1 = arith.constant 0 : index
    %c0_2 = arith.constant 0 : index
    %1 = vector.load %arg2[%c0_1, %c0_2] : memref<32x128xf32, #tpu.memory_space<vmem>>, vector<32x128xf32>
    tpu.vector_store %arg2[%c0_1, %c0_2], %0 {strides = array<i32>} : memref<32x128xf32, #tpu.memory_space<vmem>>, vector<32x128xf32>,
    return
  }
  func.func @transform_0(%arg0: i32) -> (i32, i32) {
    %c0_i32 = arith.constant 0 : i32
    %c0_i32_0 = arith.constant 0 : i32
    return %arg0, %c0_i32 : i32, i32
  }
  func.func @transform_1(%arg0: i32) -> (i32, i32) {
    %c0_i32 = arith.constant 0 : i32
    %c0_i32_0 = arith.constant 0 : i32
    return %arg0, %c0_i32 : i32, i32
  }
}

</mosaic_0001>

<llo_original>
// kernel: tpu_custom_call.1
$region0: #{tpu_custom_call.1}
  #allocation0 [shape = 'u32[]', space=smem, size = 0x4, offset = 0x4, fixed_abs, tag = 'smem constant byte address 0x4 - core index']
  #allocation1 [shape = 'u32[72,128]{1,0:T(1,128)}', space=vmem, size = 0x9000, scoped, tag = 'internal scratch']
  %s0 = inlined_call_operand.hbm [shape: f32[64,128], index: 0, kind: input, shape index: {}]
  %s1 = inlined_call_operand.hbm [shape: f32[64,128], index: 1, kind: output, shape index: {}]
  %s2 = sld [smem:[#allocation0]]
  $region41: #{tpu_custom_call.1} parent=0
    _
  %s4 = ssub.s32 1, %s2
  %s5 = scalar_select 0, %s4, %s2
  $region1: #{tpu_custom_call.1} parent=0
    #allocation2 [shape = 'u8[32768]{0}', space=vmem, size = 0x8000, scoped, tag = 'input window, operand 0']
    #allocation3 [shape = 's32[2]{0}', space=sflag, size = 0x8, scoped, tag = 'scoped memory for tpu_custom_call.1']
    #allocation4 [shape = 's32[2]{0}', space=sflag, size = 0x8, scoped, tag = 'scoped memory for tpu_custom_call.1']
    #allocation5 [shape = 'u8[32768]{0}', space=vmem, size = 0x8000, scoped, tag = 'output window, operand 0']
    %6 = vsyncpa [#allocation3], 0
    %s7 = scalar_lea.sflag [#allocation3], 1
    %8 = vsyncpa %s7, 0
    %9 = vsyncpa [#allocation4], 0
    %s10 = scalar_lea.sflag [#allocation4], 1
    %11 = vsyncpa %s10, 0
    loop: start=0, step=1, limit=4
    $region2: #{tpu_custom_call.1} parent=1 // loop_pre_header
      _
    $region3: #{tpu_custom_call.1} parent=1 // loop_header
      %s13 = sphi 0, %s17
      %p14 = scmp.ge.s32.totalorder %s13, 4
      %s23 = sphi 0, %s25
      %s26 = sphi 0, %s23
      %s27 = sphi 0, %s26
      %s43 = sphi 0, %s27
      %s49 = sphi 0, %s51
      %s52 = sphi 0, %s49
      %s53 = sphi 0, %s52
      %s69 = sphi 0, %s53
    $region4: #{tpu_custom_call.1} parent=1 // loop_header_branch
      %16 = sbr.rel (%p14) target = $region8
    $region5: #{tpu_custom_call.1} parent=1 // loop_body
      %s18 = ssub.s32 %s13, 1
      %s19 = ssub.s32 %s13, 2
      %s20 = sadd.s32 %s13, 1
      %s21 = ssub.s32 %s13, %s20
      %p22 = scmp.eq.s32.totalorder %s21, 0
      %s24 = sadd.s32 %s23, 1
      %s25 = scalar_select %p22, %s23, %s24
      %p28 = pneg %p22
      %p29 = scmp.eq.s32.totalorder %s13, 1
      %p30 = por %p28, %p29
      %p31 = scmp.ne.s32.totalorder %s23, %s26
      %p32 = scmp.eq.s32.totalorder %s13, 0
      %p33 = por %p31, %p32
      %p34 = scmp.ne.s32.totalorder %s23, %s26
      %p35 = scmp.eq.s32.totalorder %s18, 1
      %p36 = por %p34, %p35
      %p37 = scmp.ne.s32.totalorder %s26, %s27
      %p38 = scmp.eq.s32.totalorder %s18, 0
      %p39 = por %p37, %p38
      %p40 = scmp.ne.s32.totalorder %s26, %s27
      %p41 = scmp.eq.s32.totalorder %s19, 1
      %p42 = por %p40, %p41
      %p44 = scmp.ne.s32.totalorder %s27, %s43
      %p45 = scmp.eq.s32.totalorder %s19, 0
      %p46 = por %p44, %p45
      %s47 = ssub.s32 %s13, %s20
      %p48 = scmp.eq.s32.totalorder %s47, 0
      %s50 = sadd.s32 %s49, 1
      %s51 = scalar_select %p48, %s49, %s50
      %p54 = pneg %p48
      %p55 = scmp.eq.s32.totalorder %s13, 1
      %p56 = por %p54, %p55
      %p57 = scmp.ne.s32.totalorder %s49, %s52
      %p58 = scmp.eq.s32.totalorder %s13, 0
      %p59 = por %p57, %p58
      %p60 = scmp.ne.s32.totalorder %s49, %s52
      %p61 = scmp.eq.s32.totalorder %s18, 1
      %p62 = por %p60, %p61
      %p63 = scmp.ne.s32.totalorder %s52, %s53
      %p64 = scmp.eq.s32.totalorder %s18, 0
      %p65 = por %p63, %p64
      %p66 = scmp.ne.s32.totalorder %s52, %s53
      %p67 = scmp.eq.s32.totalorder %s19, 1
      %p68 = por %p66, %p67
      %p70 = scmp.ne.s32.totalorder %s53, %s69
      %p71 = scmp.eq.s32.totalorder %s19, 0
      %p72 = por %p70, %p71
      %p73 = scmp.le.s32.totalorder 1, %s13
      %p74 = scmp.lt.s32.totalorder %s13, 3
      %p75 = pnand %p73, %p74
      %p76 = pneg %p75
      // Predicated region
      $region9: #{tpu_custom_call.1} parent=5 // pred_check
        _
      $region10: #{tpu_custom_call.1} parent=5 // pred_check_branch
        %78 = sbr.rel (%p75) target = $region12
      $region11: #{tpu_custom_call.1} parent=5 // pred_region
        %s79 = ssub.s32 %s13, 1
      $region12: #{tpu_custom_call.1} parent=5 // pred_fallthru
        _
      %p80 = scmp.lt.s32.totalorder %s13, 2
      // Predicated region
      $region13: #{tpu_custom_call.1} parent=5 // pred_check
        %p81 = pneg %p80
      $region14: #{tpu_custom_call.1} parent=5 // pred_check_branch
        %83 = sbr.rel (%p81) target = $region16
      $region15: #{tpu_custom_call.1} parent=5 // pred_region
        // Predicated region
        $region17: #{tpu_custom_call.1} parent=15 // pred_check
          %p84 = pneg %p33
        $region18: #{tpu_custom_call.1} parent=15 // pred_check_branch
          %86 = sbr.rel (%p84) target = $region20
        $region19: #{tpu_custom_call.1} parent=15 // pred_region
          %s87 = sand.u32 %s23, 1
          %s88 = scalar_lea.sflag [#allocation3], %s87
          %s89 = sand.u32 %s23, 1
          %s90 = smul.addr %s89, 32
          %s91 = scalar_lea.vmem [#allocation2], %s90
          %s92 = smul.u32 4, %s13
          %94 = vsyncadd %s88, 0
          %s95 = smul.addr %s92, 8
          %s96 = scalar_lea.hbm %s0, %s95
          %s97 = sshll.u32 %s96, 4
          %s98 = int_to_ptr.hbm [resolvable:$true] %s97
          %s99 = sshll.u32 %s91, 4
          %s100 = int_to_ptr.vmem [resolvable:$true] %s99
          %105 = dma.hbm_to_vmem [thread:$0]  %s98, 512, %s100, %s88, 128, 128, 8
        $region20: #{tpu_custom_call.1} parent=15 // pred_fallthru
          _
      $region16: #{tpu_custom_call.1} parent=5 // pred_fallthru
        _
      %p106 = scmp.le.s32.totalorder 1, %s13
      %p107 = scmp.lt.s32.totalorder %s13, 3
      %p108 = pnand %p106, %p107
      %p109 = pneg %p108
      // Predicated region
      $region21: #{tpu_custom_call.1} parent=5 // pred_check
        _
      $region22: #{tpu_custom_call.1} parent=5 // pred_check_branch
        %111 = sbr.rel (%p108) target = $region24
      $region23: #{tpu_custom_call.1} parent=5 // pred_region
        %s112 = ssub.s32 %s13, 1
        %s113 = sand.u32 %s26, 1
        %s114 = scalar_lea.sflag [#allocation3], %s113
        %s115 = sand.u32 %s26, 1
        %s116 = smul.addr %s115, 32
        %s117 = scalar_lea.vmem [#allocation2], %s116
        // Predicated region
        $region25: #{tpu_custom_call.1} parent=23 // pred_check
          %p118 = pneg %p39
        $region26: #{tpu_custom_call.1} parent=23 // pred_check_branch
          %120 = sbr.rel (%p118) target = $region28
        $region27: #{tpu_custom_call.1} parent=23 // pred_region
          %122 = dma.done %s114, 512
        $region28: #{tpu_custom_call.1} parent=23 // pred_fallthru
          _
        %s123 = sand.u32 %s26, 1
        %s124 = scalar_lea.sflag [#allocation3], %s123
        %s125 = sand.u32 %s26, 1
        %s126 = smul.addr %s125, 32
        %s127 = scalar_lea.vmem [#allocation2], %s126
        %p128 = pneg %p39
        %p129 = pneg %p36
        %p130 = pneg %p65
        %p131 = pneg %p62
        %s132 = sand.u32 %s52, 1
        %s133 = scalar_lea.sflag [#allocation4], %s132
        %s134 = sand.u32 %s52, 1
        %s135 = smul.addr %s134, 32
        %s136 = scalar_lea.vmem [#allocation5], %s135
        %s137 = smul.u32 4, %s18
        %s138 = smul.u32 4, %s18
        %v139 = vld [vmem:[%s117] sm:$0xff]
        %v140 = vld [vmem:[%s117 + $0x8] sm:$0xff]
        %v141 = vld [vmem:[%s117 + $0x10] sm:$0xff]
        %v142 = vld [vmem:[%s117 + $0x18] sm:$0xff]
        %143 = vst [vmem:[%s136] sm:$0xff] %v139
        %144 = vst [vmem:[%s136 + $0x8] sm:$0xff] %v140
        %145 = vst [vmem:[%s136 + $0x10] sm:$0xff] %v141
        %146 = vst [vmem:[%s136 + $0x18] sm:$0xff] %v142
        %s147 = sand.u32 %s52, 1
        %s148 = scalar_lea.sflag [#allocation4], %s147
        %s149 = sand.u32 %s52, 1
        %s150 = smul.addr %s149, 32
        %s151 = scalar_lea.vmem [#allocation5], %s150
        // Predicated region
        $region29: #{tpu_custom_call.1} parent=23 // pred_check
          %p152 = pneg %p62
        $region30: #{tpu_custom_call.1} parent=23 // pred_check_branch
          %154 = sbr.rel (%p152) target = $region32
        $region31: #{tpu_custom_call.1} parent=23 // pred_region
          %s155 = smul.u32 4, %s18
          %157 = vsyncadd %s148, 0
          %s158 = smul.addr %s155, 8
          %s159 = scalar_lea.hbm %s1, %s158
          %s160 = sshll.u32 %s151, 4
          %s161 = int_to_ptr.vmem [resolvable:$true] %s160
          %s162 = sshll.u32 %s159, 4
          %s163 = int_to_ptr.hbm [resolvable:$true] %s162
          %168 = dma.vmem_to_hbm [thread:$0]  %s161, 512, %s163, %s148, 128, 128, 8
        $region32: #{tpu_custom_call.1} parent=23 // pred_fallthru
          _
      $region24: #{tpu_custom_call.1} parent=5 // pred_fallthru
        _
      %p169 = scmp.le.s32.totalorder 2, %s13
      // Predicated region
      $region33: #{tpu_custom_call.1} parent=5 // pred_check
        %p170 = pneg %p169
      $region34: #{tpu_custom_call.1} parent=5 // pred_check_branch
        %172 = sbr.rel (%p170) target = $region36
      $region35: #{tpu_custom_call.1} parent=5 // pred_region
        %s173 = ssub.s32 %s13, 2
        // Predicated region
        $region37: #{tpu_custom_call.1} parent=35 // pred_check
          %p174 = pneg %p68
        $region38: #{tpu_custom_call.1} parent=35 // pred_check_branch
          %176 = sbr.rel (%p174) target = $region40
        $region39: #{tpu_custom_call.1} parent=35 // pred_region
          %s177 = sand.u32 %s53, 1
          %s178 = scalar_lea.sflag [#allocation4], %s177
          %s179 = sand.u32 %s53, 1
          %s180 = smul.addr %s179, 32
          %s181 = scalar_lea.vmem [#allocation5], %s180
          %183 = dma.done %s178, 512
        $region40: #{tpu_custom_call.1} parent=35 // pred_fallthru
          _
      $region36: #{tpu_custom_call.1} parent=5 // pred_fallthru
        _
    $region6: #{tpu_custom_call.1} parent=1 // loop_footer
      %s17 = sadd.s32 1, %s13
    $region7: #{tpu_custom_call.1} parent=1 // loop_footer_branch
      %12 = sbr.rel target = $region3
    $region8: #{tpu_custom_call.1} parent=1 // loop_exit
      _
    %184 = vsyncpa [#allocation3], 1
    %s185 = scalar_lea.sflag [#allocation3], 1
    %186 = vsyncpa %s185, 1
    %187 = vsyncpa [#allocation4], 1
    %s188 = scalar_lea.sflag [#allocation4], 1
    %189 = vsyncpa %s188, 1

</llo_original>
